<compile_context>
chip_gen: v7x
topology: tpu7x:2x2x1
jax: 0.10.0
libtpu: 0.0.40
codegen_flags: <defaults>
</compile_context>

<pallas_src>
from functools import partial

import jax
import jax.numpy as jnp
from jax.experimental import pallas as pl
from jax.experimental.pallas import tpu as pltpu


def _conv_relu_kernel(x_ref, w_ref, b_ref, o_ref, *, H, KH):
    # x_ref: (Nb, Hp, Wp*C_in)        padded, W/C-flattened input block
    # w_ref: (KH, Wp*C_in, W*C_out)   banded weight (whole array, DMA'd once)
    # b_ref: (1, W*C_out)             lane-dense bias (f32)
    # o_ref: (Nb*H, W*C_out)          lane-dense output block (last dim % 128 == 0)
    nb, _, wpc = x_ref.shape
    wco = o_ref.shape[-1]
    m = nb * H

    acc = jnp.zeros((m, wco), jnp.float32)
    for kh in range(KH):  # static unroll: KH back-to-back MXU dots into a vreg acc
        # Sublane-offset slice along padded H, then a layout-preserving reshape
        # (H is a multiple of 8, lanes stay on Wp*C_in).
        band = x_ref[:, kh:kh + H, :].reshape(m, wpc)
        acc = acc + jnp.dot(band, w_ref[kh], preferred_element_type=jnp.float32)

    y = acc + b_ref[...]  # f32 epilogue (v5e has no bf16 VPU)
    o_ref[...] = jnp.maximum(y, 0.0).astype(o_ref.dtype)


def _padded_vmem_bytes(shape, dtype):
    """Bytes of one VMEM buffer after (sublane, lane) tiling/padding."""
    itemsize = jnp.dtype(dtype).itemsize
    sub_mult = max(8, 32 // itemsize)          # 8 (f32) / 16 (bf16) / 32 (int8)
    lane = -(-shape[-1] // 128) * 128
    sub = -(-shape[-2] // sub_mult) * sub_mult
    lead = 1
    for d in shape[:-2]:
        lead *= d
    return lead * sub * lane * itemsize


def conv2d_relu(x_nchw, weight, bias, padding=2, block_n=None,
                compute_dtype=jnp.bfloat16):
    """x_nchw: (N, C_in, H, W); weight: (C_out, C_in, KH, KW); bias: (C_out,)."""
    N, C_in, H, W = x_nchw.shape
    C_out, _, KH, KW = weight.shape
    Hp, Wp = H + 2 * padding, W + 2 * padding
    WpC, WCo = Wp * C_in, W * C_out
    out_dtype = x_nchw.dtype
    cdt = jnp.dtype(compute_dtype) if compute_dtype is not None else jnp.dtype(out_dtype)

    if WCo % 128 != 0:
        raise ValueError(
            f"W*C_out={WCo} must be a multiple of 128 for the lane-dense output "
            "layout (pad C_out or tile W before reusing this kernel).")
    if H % 8 != 0:
        raise ValueError(f"H={H} must be a multiple of 8 (merged Nb*H sublane axis).")

    # ---- layout plumbing (NCHW in/out only to match the PyTorch module) ----
    x = jnp.transpose(x_nchw, (0, 2, 3, 1))                            # NHWC
    x = jnp.pad(x, ((0, 0), (padding, padding), (padding, padding), (0, 0)))
    x = x.reshape(N, Hp, WpC).astype(cdt)                              # lanes = Wp*C_in

    # ---- banded weight: W_big[kh, p*C_in+ci, w*C_out+co] = weight[co,ci,kh,kw]
    #      iff p == w + kw.  Built once in f32, cast once to the compute dtype. ----
    w_t = jnp.transpose(weight, (2, 3, 1, 0)).astype(jnp.float32)      # (KH, KW, C_in, C_out)
    sel = (jnp.arange(Wp)[None, :, None]
           == jnp.arange(W)[:, None, None] + jnp.arange(KW)[None, None, :])
    sel = sel.astype(jnp.float32)                                      # (W, Wp, KW) 0/1 band
    w_big = jnp.einsum('wpk,hkio->hpiwo', sel, w_t)                    # (KH, Wp, C_in, W, C_out)
    w_big = w_big.reshape(KH, WpC, WCo).astype(cdt)

    b_big = jnp.tile(bias.astype(jnp.float32), W).reshape(1, WCo)      # lane-dense bias

    # ---- batch blocking from *padded* VMEM bytes (x2 for double buffering) ----
    if block_n is None:
        fixed = 2 * (_padded_vmem_bytes((KH, WpC, WCo), cdt)
                     + _padded_vmem_bytes((1, WCo), jnp.float32))
        budget = (24 << 20) - fixed            # stay well inside v7x's 32 MiB scoped VMEM
        block_n = 1
        for d in range(1, N + 1):
            if N % d:
                continue
            per = 2 * (_padded_vmem_bytes((d, Hp, WpC), cdt)
                       + _padded_vmem_bytes((d * H, WCo), out_dtype))
            if per <= budget:
                block_n = d
        # TODO(synk): for production H/W, tile the merged (Nb*H) row axis with a
        # (KH-1)-row halo instead of whole-image blocks, and on v7x prefer an even
        # number (>=4) of parallel grid steps so both TensorCores stay busy.

    grid = (N // block_n,)

    out2d = pl.pallas_call(
        partial(_conv_relu_kernel, H=H, KH=KH),
        out_shape=jax.ShapeDtypeStruct((N * H, WCo), out_dtype),
        grid=grid,
        in_specs=[
            pl.BlockSpec((block_n, Hp, WpC), lambda nb: (nb, 0, 0)),
            # Whole weight, constant block index -> DMA'd once, not per grid step.
            pl.BlockSpec((KH, WpC, WCo), lambda nb: (0, 0, 0)),
            pl.BlockSpec((1, WCo), lambda nb: (0, 0)),
        ],
        out_specs=pl.BlockSpec((block_n * H, WCo), lambda nb: (nb, 0)),
        compiler_params=pltpu.CompilerParams(
            dimension_semantics=("parallel",),
            vmem_limit_bytes=32 * 1024 * 1024),
    )(x, w_big, b_big)

    # Lane-dense (N*H, W*C_out) -> (N, H, W, C_out) -> NCHW (layout plumbing only).
    out = out2d.reshape(N, H, W, C_out)
    return jnp.transpose(out, (0, 3, 1, 2))


if __name__ == "__main__":
    key = jax.random.PRNGKey(0)
    kx, kw, kb = jax.random.split(key, 3)

    N, C_in, H, W = 2, 4, 16, 16
    C_out, K, P = 8, 5, 2

    fan_in = C_in * K * K
    bound = 1.0 / (fan_in ** 0.5)
    x = jax.random.normal(kx, (N, C_in, H, W), dtype=jnp.float32)
    weight = jax.random.uniform(kw, (C_out, C_in, K, K), minval=-bound, maxval=bound,
                                dtype=jnp.float32)
    bias = jax.random.uniform(kb, (C_out,), minval=-bound, maxval=bound,
                              dtype=jnp.float32)

    # Reference: XLA conv (same NCHW/OIHW convention as PyTorch) + bias + ReLU.
    ref = jax.lax.conv_general_dilated(
        x, weight, window_strides=(1, 1), padding=((P, P), (P, P)),
        dimension_numbers=("NCHW", "OIHW", "NCHW"))
    ref = jnp.maximum(ref + bias[None, :, None, None], 0.0)

    # Default path: bf16 operands, f32 accumulate / epilogue.
    out_bf16 = conv2d_relu(x, weight, bias, padding=P)
    jax.block_until_ready(out_bf16)
    assert out_bf16.shape == (N, C_out, H, W)
    assert jnp.allclose(out_bf16, ref, atol=5e-2, rtol=5e-2), "bf16 path mismatch"

    # Full-precision path: exact PyTorch-f32 semantics.
    out_f32 = conv2d_relu(x, weight, bias, padding=P, compute_dtype=jnp.float32)
    jax.block_until_ready(out_f32)
    assert jnp.allclose(out_f32, ref, atol=1e-3, rtol=1e-3), "f32 path mismatch"

    print("KERNEL_OK")
</pallas_src>

<mosaic_0001>
module attributes {stable_mosaic.version = 11 : i64} {
  func.func @_conv_relu_kernel(%arg0: i32, %arg1: memref<2x20x80xbf16, #tpu.memory_space<vmem>>, %arg2: memref<5x80x128xbf16, #tpu.memory_space<vmem>>, %arg3: memref<1x128xf32, #tpu.memory_space<vmem>>, %arg4: memref<32x128xf32, #tpu.memory_space<vmem>>) attributes {dimension_semantics = [#tpu.dimension_semantics<parallel>], iteration_bounds = array<i64: 1>, scalar_prefetch = 0 : i64, scratch_operands = 0 : i64, tpu.core_type = #tpu.core_type<tc>, window_params = [{transform_indices = @transform_0, window_bounds = array<i64: 2, 20, 80>}, {pipeline_mode = #tpu.pipeline_mode<synchronous>, transform_indices = @transform_1, window_bounds = array<i64: 5, 80, 128>}, {pipeline_mode = #tpu.pipeline_mode<synchronous>, transform_indices = @transform_2, window_bounds = array<i64: 1, 128>}, {transform_indices = @transform_3, window_bounds = array<i64: 32, 128>}]} {
    %cst = arith.constant 0.000000e+00 : f32
    %0 = vector.broadcast %cst : f32 to vector<32x128xf32>
    %c0 = arith.constant 0 : index
    %c0_0 = arith.constant 0 : index
    %c0_1 = arith.constant 0 : index
    %1 = vector.load %arg1[%c0, %c0_0, %c0_1] : memref<2x20x80xbf16, #tpu.memory_space<vmem>>, vector<2x16x80xbf16>
    %2 = vector.shape_cast %1 : vector<2x16x80xbf16> to vector<32x80xbf16>
    %c0_2 = arith.constant 0 : index
    %c0_3 = arith.constant 0 : index
    %c0_4 = arith.constant 0 : index
    %3 = vector.load %arg2[%c0_2, %c0_3, %c0_4] : memref<5x80x128xbf16, #tpu.memory_space<vmem>>, vector<1x80x128xbf16>
    %4 = vector.shape_cast %3 : vector<1x80x128xbf16> to vector<80x128xbf16>
    %cst_5 = arith.constant dense<0.000000e+00> : vector<32x128xf32>
    %5 = tpu.matmul %2, %4, %cst_5 {dimension_numbers = #tpu.dot_dimension_numbers<[1], [0], [0], [1], [0, 0, 1, 1], [], []>} : vector<32x80xbf16>, vector<80x128xbf16>, vector<32x128xf32> -> vector<32x128xf32>
    %6 = arith.addf %0, %5 : vector<32x128xf32>
    %c0_6 = arith.constant 0 : index
    %c1 = arith.constant 1 : index
    %c0_7 = arith.constant 0 : index
    %7 = vector.load %arg1[%c0_6, %c1, %c0_7] : memref<2x20x80xbf16, #tpu.memory_space<vmem>>, vector<2x16x80xbf16>
    %8 = vector.shape_cast %7 : vector<2x16x80xbf16> to vector<32x80xbf16>
    %c1_8 = arith.constant 1 : index
    %c0_9 = arith.constant 0 : index
    %c0_10 = arith.constant 0 : index
    %9 = vector.load %arg2[%c1_8, %c0_9, %c0_10] : memref<5x80x128xbf16, #tpu.memory_space<vmem>>, vector<1x80x128xbf16>
    %10 = vector.shape_cast %9 : vector<1x80x128xbf16> to vector<80x128xbf16>
    %cst_11 = arith.constant dense<0.000000e+00> : vector<32x128xf32>
    %11 = tpu.matmul %8, %10, %cst_11 {dimension_numbers = #tpu.dot_dimension_numbers<[1], [0], [0], [1], [0, 0, 1, 1], [], []>} : vector<32x80xbf16>, vector<80x128xbf16>, vector<32x128xf32> -> vector<32x128xf32>
    %12 = arith.addf %6, %11 : vector<32x128xf32>
    %c0_12 = arith.constant 0 : index
    %c2 = arith.constant 2 : index
    %c0_13 = arith.constant 0 : index
    %13 = vector.load %arg1[%c0_12, %c2, %c0_13] : memref<2x20x80xbf16, #tpu.memory_space<vmem>>, vector<2x16x80xbf16>
    %14 = vector.shape_cast %13 : vector<2x16x80xbf16> to vector<32x80xbf16>
    %c2_14 = arith.constant 2 : index
    %c0_15 = arith.constant 0 : index
    %c0_16 = arith.constant 0 : index
    %15 = vector.load %arg2[%c2_14, %c0_15, %c0_16] : memref<5x80x128xbf16, #tpu.memory_space<vmem>>, vector<1x80x128xbf16>
    %16 = vector.shape_cast %15 : vector<1x80x128xbf16> to vector<80x128xbf16>
    %cst_17 = arith.constant dense<0.000000e+00> : vector<32x128xf32>
    %17 = tpu.matmul %14, %16, %cst_17 {dimension_numbers = #tpu.dot_dimension_numbers<[1], [0], [0], [1], [0, 0, 1, 1], [], []>} : vector<32x80xbf16>, vector<80x128xbf16>, vector<32x128xf32> -> vector<32x128xf32>
    %18 = arith.addf %12, %17 : vector<32x128xf32>
    %c0_18 = arith.constant 0 : index
    %c3 = arith.constant 3 : index
    %c0_19 = arith.constant 0 : index
    %19 = vector.load %arg1[%c0_18, %c3, %c0_19] : memref<2x20x80xbf16, #tpu.memory_space<vmem>>, vector<2x16x80xbf16>
    %20 = vector.shape_cast %19 : vector<2x16x80xbf16> to vector<32x80xbf16>
    %c3_20 = arith.constant 3 : index
    %c0_21 = arith.constant 0 : index
    %c0_22 = arith.constant 0 : index
    %21 = vector.load %arg2[%c3_20, %c0_21, %c0_22] : memref<5x80x128xbf16, #tpu.memory_space<vmem>>, vector<1x80x128xbf16>
    %22 = vector.shape_cast %21 : vector<1x80x128xbf16> to vector<80x128xbf16>
    %cst_23 = arith.constant dense<0.000000e+00> : vector<32x128xf32>
    %23 = tpu.matmul %20, %22, %cst_23 {dimension_numbers = #tpu.dot_dimension_numbers<[1], [0], [0], [1], [0, 0, 1, 1], [], []>} : vector<32x80xbf16>, vector<80x128xbf16>, vector<32x128xf32> -> vector<32x128xf32>
    %24 = arith.addf %18, %23 : vector<32x128xf32>
    %c0_24 = arith.constant 0 : index
    %c4 = arith.constant 4 : index
    %c0_25 = arith.constant 0 : index
    %25 = vector.load %arg1[%c0_24, %c4, %c0_25] : memref<2x20x80xbf16, #tpu.memory_space<vmem>>, vector<2x16x80xbf16>
    %26 = vector.shape_cast %25 : vector<2x16x80xbf16> to vector<32x80xbf16>
    %c4_26 = arith.constant 4 : index
    %c0_27 = arith.constant 0 : index
    %c0_28 = arith.constant 0 : index
    %27 = vector.load %arg2[%c4_26, %c0_27, %c0_28] : memref<5x80x128xbf16, #tpu.memory_space<vmem>>, vector<1x80x128xbf16>
    %28 = vector.shape_cast %27 : vector<1x80x128xbf16> to vector<80x128xbf16>
    %cst_29 = arith.constant dense<0.000000e+00> : vector<32x128xf32>
    %29 = tpu.matmul %26, %28, %cst_29 {dimension_numbers = #tpu.dot_dimension_numbers<[1], [0], [0], [1], [0, 0, 1, 1], [], []>} : vector<32x80xbf16>, vector<80x128xbf16>, vector<32x128xf32> -> vector<32x128xf32>
    %30 = arith.addf %24, %29 : vector<32x128xf32>
    %c0_30 = arith.constant 0 : index
    %c0_31 = arith.constant 0 : index
    %31 = vector.load %arg3[%c0_30, %c0_31] : memref<1x128xf32, #tpu.memory_space<vmem>>, vector<1x128xf32>
    %32 = vector.broadcast %31 : vector<1x128xf32> to vector<32x128xf32>
    %33 = arith.addf %30, %32 : vector<32x128xf32>
    %cst_32 = arith.constant 0.000000e+00 : f32
    %34 = vector.broadcast %cst_32 : f32 to vector<32x128xf32>
    %35 = arith.maximumf %33, %34 : vector<32x128xf32>
    %c0_33 = arith.constant 0 : index
    %c0_34 = arith.constant 0 : index
    %36 = vector.load %arg4[%c0_33, %c0_34] : memref<32x128xf32, #tpu.memory_space<vmem>>, vector<32x128xf32>
    tpu.vector_store %arg4[%c0_33, %c0_34], %35 {strides = array<i32>} : memref<32x128xf32, #tpu.memory_space<vmem>>, vector<32x128xf32>,
    return
  }
  func.func @transform_0(%arg0: i32) -> (i32, i32, i32) {
    %c0_i32 = arith.constant 0 : i32
    %c0_i32_0 = arith.constant 0 : i32
    %c0_i32_1 = arith.constant 0 : i32
    return %arg0, %c0_i32, %c0_i32_0 : i32, i32, i32
  }
  func.func @transform_1(%arg0: i32) -> (i32, i32, i32) {
    %c0_i32 = arith.constant 0 : i32
    %c0_i32_0 = arith.constant 0 : i32
    %c0_i32_1 = arith.constant 0 : i32
    %c0_i32_2 = arith.constant 0 : i32
    return %c0_i32, %c0_i32_0, %c0_i32_1 : i32, i32, i32
  }
  func.func @transform_2(%arg0: i32) -> (i32, i32) {
    %c0_i32 = arith.constant 0 : i32
    %c0_i32_0 = arith.constant 0 : i32
    %c0_i32_1 = arith.constant 0 : i32
    return %c0_i32, %c0_i32_0 : i32, i32
  }
  func.func @transform_3(%arg0: i32) -> (i32, i32) {
    %c0_i32 = arith.constant 0 : i32
    %c0_i32_0 = arith.constant 0 : i32
    return %arg0, %c0_i32 : i32, i32
  }
}

</mosaic_0001>

<llo_original>
// kernel: tpu_custom_call.1
$region0: #{tpu_custom_call.1}
  #allocation0 [shape = 'u32[]', space=smem, size = 0x4, offset = 0x4, fixed_abs, tag = 'smem constant byte address 0x4 - core index']
  #allocation1 [shape = 'u32[144,128]{1,0:T(1,128)}', space=vmem, size = 0x12000, scoped, tag = 'internal scratch']
  %s0 = inlined_call_operand.vmem [shape: bf16[2,20,80], index: 0, kind: input, shape index: {}]
  %s1 = inlined_call_operand.hbm [shape: bf16[5,80,128], index: 1, kind: input, shape index: {}]
  %s2 = inlined_call_operand.vmem [shape: f32[1,128], index: 2, kind: input, shape index: {}]
  %s3 = inlined_call_operand.hbm [shape: f32[32,128], index: 3, kind: output, shape index: {}]
  %s4 = sld [smem:[#allocation0]]
  $region26: #{tpu_custom_call.1} parent=0
    _
  %s6 = ssub.s32 1, %s4
  %s7 = scalar_select 0, %s6, %s4
  $region1: #{tpu_custom_call.1} parent=0
    #allocation2 [shape = 'u8[102400]{0}', space=vmem, size = 0x19000, scoped, tag = 'input window, operand 1, single buffered']
    #allocation3 [shape = 's32[1]{0}', space=sflag, size = 0x4, scoped, tag = 'scoped memory for tpu_custom_call.1']
    #allocation4 [shape = 's32[1]{0}', space=sflag, size = 0x4, scoped, tag = 'scoped memory for tpu_custom_call.1']
    #allocation5 [shape = 'u8[16384]{0}', space=vmem, size = 0x4000, scoped, tag = 'output window, operand 0, single buffered']
    %8 = vsyncpa [#allocation3], 0
    %9 = vsyncpa [#allocation4], 0
    // Predicated region
    $region2: #{tpu_custom_call.1} parent=1 // pred_check
      _
    $region3: #{tpu_custom_call.1} parent=1 // pred_check_branch
      %11 = sbr.rel (0) target = $region5
    $region4: #{tpu_custom_call.1} parent=1 // pred_region
      _
    $region5: #{tpu_custom_call.1} parent=1 // pred_fallthru
      _
    // Predicated region
    $region6: #{tpu_custom_call.1} parent=1 // pred_check
      _
    $region7: #{tpu_custom_call.1} parent=1 // pred_check_branch
      %13 = sbr.rel (0) target = $region9
    $region8: #{tpu_custom_call.1} parent=1 // pred_region
      %s15 = ssub.s32 3200, 3200
      %16 = vsyncadd [#allocation3], %s15
      %s17 = sshll.u32 [#allocation2], 4
      %s18 = int_to_ptr.vmem [resolvable:$true] %s17
      %23 = dma.hbm_to_vmem [thread:$0]  %s1, 3200, %s18, [#allocation3], 64, 64, 4
    $region9: #{tpu_custom_call.1} parent=1 // pred_fallthru
      _
    // Predicated region
    $region10: #{tpu_custom_call.1} parent=1 // pred_check
      _
    $region11: #{tpu_custom_call.1} parent=1 // pred_check_branch
      %25 = sbr.rel (0) target = $region13
    $region12: #{tpu_custom_call.1} parent=1 // pred_region
      _
    $region13: #{tpu_custom_call.1} parent=1 // pred_fallthru
      _
    // Predicated region
    $region14: #{tpu_custom_call.1} parent=1 // pred_check
      _
    $region15: #{tpu_custom_call.1} parent=1 // pred_check_branch
      %27 = sbr.rel (0) target = $region17
    $region16: #{tpu_custom_call.1} parent=1 // pred_region
      %28 = dma.done [#allocation3], 3200
    $region17: #{tpu_custom_call.1} parent=1 // pred_fallthru
      _
    %v30 = vld [vmem:[%s0] sm:$0xf]
    %v31 = vld [vmem:[%s0 + $0x4] sm:$0xf]
    %v32 = vld [vmem:[%s0 + $0xc] sm:$0xf]
    %v33 = vld [vmem:[%s0 + $0x10] sm:$0xf]
    %v34 = vld [vmem:[#allocation2] sm:$0xf]
    %v35 = vld [vmem:[#allocation2 + $0x4] sm:$0xf]
    %v36 = vld [vmem:[#allocation2 + $0x8] sm:$0xf]
    %v37 = vld [vmem:[#allocation2 + $0xc] sm:$0xf]
    %v38 = vld [vmem:[#allocation2 + $0x10] sm:$0xf]
    %v39 = vld [vmem:[#allocation2 + $0x14] sm:$0xf]
    %v40 = vld [vmem:[#allocation2 + $0x18] sm:$0xf]
    %v41 = vld [vmem:[#allocation2 + $0x1c] sm:$0xf]
    %v42 = vld [vmem:[#allocation2 + $0x20] sm:$0xf]
    %v43 = vld [vmem:[#allocation2 + $0x24] sm:$0xf]
    %v44 = vld [vmem:[%s0 + $0x8] sm:$0x1]
    %v45 = vld [vmem:[%s0 + $0x14] sm:$0x1]
    %vm46 = vsmask.f32 3328
    %vm47 = vsmask.f32 7440
    %vm48 = vmor %vm46, %vm47
    %v50 = vshrl.u32 %v30, 16
    %v52 = vrot.slane %v50, 4
    %v53 = vshll.u32 %v30, 16
    %v55 = vrot.slane %v53, 5
    %v56 = vor.u32 %v52, %v55
    %v57 = vrot.slane %v56, 4
    %v59 = vshll.u32 %v31, 16
    %v61 = vrot.slane %v59, 5
    %v62 = vsel %vm48, %v57, %v61
    %v63 = vshrl.u32 %v31, 16
    %v65 = vrot.slane %v63, 4
    %v66 = vor.u32 %v65, %v61
    %v67 = vrot.slane %v66, 4
    %v69 = vshll.u32 %v44, 16
    %v71 = vrot.slane %v69, 5
    %v72 = vsel %vm48, %v67, %v71
    %v74 = vshrl.u32 %v32, 16
    %v76 = vrot.slane %v74, 4
    %v77 = vshll.u32 %v32, 16
    %v79 = vrot.slane %v77, 5
    %v80 = vor.u32 %v76, %v79
    %v81 = vrot.slane %v80, 4
    %v83 = vshll.u32 %v33, 16
    %v85 = vrot.slane %v83, 5
    %v86 = vsel %vm48, %v81, %v85
    %v87 = vshrl.u32 %v33, 16
    %v89 = vrot.slane %v87, 4
    %v90 = vor.u32 %v89, %v85
    %v91 = vrot.slane %v90, 4
    %v93 = vshll.u32 %v45, 16
    %v95 = vrot.slane %v93, 5
    %v96 = vsel %vm48, %v91, %v95
    %s97 = scalar_lea.vmem [#allocation2], 40
    %v98 = vld [vmem:[%s97] sm:$0xf]
    %v99 = vld [vmem:[%s97 + $0x4] sm:$0xf]
    %v100 = vld [vmem:[%s97 + $0x8] sm:$0xf]
    %v101 = vld [vmem:[%s97 + $0xc] sm:$0xf]
    %v102 = vld [vmem:[%s97 + $0x10] sm:$0xf]
    %v103 = vld [vmem:[%s97 + $0x14] sm:$0xf]
    %v104 = vld [vmem:[%s97 + $0x18] sm:$0xf]
    %v105 = vld [vmem:[%s97 + $0x1c] sm:$0xf]
    %v106 = vld [vmem:[%s97 + $0x20] sm:$0xf]
    %v107 = vld [vmem:[%s97 + $0x24] sm:$0xf]
    %v108 = vunpack.c.l.b16 %v62
    %v109 = vunpack.c.l.b16 %v72
    %v110 = vunpack.c.l.b16 %v86
    %v111 = vunpack.c.l.b16 %v96
    %v112 = vpack.c.b16 %v109, %v108
    %v113 = vpack.c.b16 %v111, %v110
    %v124 = vunpack.c.l.b16 %v98
    %v125 = vunpack.c.l.b16 %v99
    %v126 = vunpack.c.l.b16 %v100
    %v127 = vunpack.c.l.b16 %v101
    %v128 = vunpack.c.l.b16 %v102
    %v129 = vunpack.c.l.b16 %v103
    %v130 = vunpack.c.l.b16 %v104
    %v131 = vunpack.c.l.b16 %v105
    %v132 = vunpack.c.l.b16 %v106
    %v133 = vunpack.c.l.b16 %v107
    %v134 = vpack.c.b16 %v125, %v124
    %v135 = vpack.c.b16 %v127, %v126
    %v136 = vpack.c.b16 %v129, %v128
    %v137 = vpack.c.b16 %v131, %v130
    %v138 = vpack.c.b16 %v133, %v132
    %vm144 = vcmask 654336
    %v146 = vsel %vm144, %v112, 0
    %v149 = vsel %vm144, %v113, 0
    %151 = vmatprep.subr.bf16.mxu0 0
    %152 = vmatpush1.bf16.msra.mxu0 %v134
    %153 = vmatprep.subr.bf16.mxu0 0
    %154 = vmatpush1.bf16.msra.mxu0 %v135
    %155 = vmatprep.subr.bf16.mxu0 0
    %156 = vmatpush1.bf16.msra.mxu0 %v136
    %157 = vmatprep.subr.bf16.mxu0 0
    %158 = vmatpush1.bf16.msra.mxu0 %v137
    %159 = vmatprep.subr.bf16.mxu0 0
    %160 = vmatpush1.bf16.msra.mxu0 %v138
    %161 = vmatprep.subr.bf16.mxu0 0
    %162 = vmatpush1.bf16.msra.mxu0 0
    %163 = vmatprep.subr.bf16.mxu0 0
    %164 = vmatpush1.bf16.msra.mxu0 0
    %165 = vmatprep.subr.bf16.mxu0 0
    %166 = vmatpush1.bf16.msra.mxu0 0
    %167 = vmatprep.subr.bf16.mxu0 0
    %168 = vmatpush1.bf16.msra.mxu0 0
    %169 = vmatprep.subr.bf16.mxu0 0
    %170 = vmatpush1.bf16.msra.mxu0 0
    %171 = vmatprep.subr.bf16.mxu0 0
    %172 = vmatpush1.bf16.msra.mxu0 0
    %173 = vmatprep.subr.bf16.mxu0 0
    %174 = vmatpush1.bf16.msra.mxu0 0
    %175 = vmatprep.subr.bf16.mxu0 0
    %176 = vmatpush1.bf16.msra.mxu0 0
    %177 = vmatprep.subr.bf16.mxu0 0
    %178 = vmatpush1.bf16.msra.mxu0 0
    %179 = vmatprep.subr.bf16.mxu0 0
    %180 = vmatpush1.bf16.msra.mxu0 0
    %181 = vmatprep.subr.bf16.mxu0 0
    %182 = vmatpush1.bf16.msra.mxu0 0
    %183 = vmatprep.mubr.bf16.mxu0 0
    %184 = vmatmul.mubr.bf16.gmra.mrb[0].mxu0 %v146
    %v185 = vpop.f32.mrb[0].mxu0
    %v186 = vadd.f32 0.0, %v185
    %v187 = vpop.f32.mrb[0].mxu0
    %v188 = vpop.f32.mrb[0].mxu0
    %v189 = vadd.f32 0.0, %v188
    %v190 = vpop.f32.mrb[0].mxu0
    %191 = vmatprep.mubr.bf16.mxu0 0
    %192 = vmatmul.mubr.bf16.gmra.mrb[0].mxu0 %v149
    %v193 = vpop.f32.mrb[0].mxu0
    %v194 = vadd.f32 0.0, %v193
    %v195 = vpop.f32.mrb[0].mxu0
    %v196 = vpop.f32.mrb[0].mxu0
    %v197 = vadd.f32 0.0, %v196
    %v198 = vpop.f32.mrb[0].mxu0
    %199 = vdwg.mxu0
    %v204 = vunpack.c.l.b16 %v30
    %v205 = vunpack.c.l.b16 %v31
    %v206 = vunpack.c.l.b16 %v32
    %v207 = vunpack.c.l.b16 %v33
    %v208 = vpack.c.b16 %v205, %v204
    %v209 = vpack.c.b16 %v207, %v206
    %v220 = vunpack.c.l.b16 %v34
    %v221 = vunpack.c.l.b16 %v35
    %v222 = vunpack.c.l.b16 %v36
    %v223 = vunpack.c.l.b16 %v37
    %v224 = vunpack.c.l.b16 %v38
    %v225 = vunpack.c.l.b16 %v39
    %v226 = vunpack.c.l.b16 %v40
    %v227 = vunpack.c.l.b16 %v41
    %v228 = vunpack.c.l.b16 %v42
    %v229 = vunpack.c.l.b16 %v43
    %v230 = vpack.c.b16 %v221, %v220
    %v231 = vpack.c.b16 %v223, %v222
    %v232 = vpack.c.b16 %v225, %v224
    %v233 = vpack.c.b16 %v227, %v226
    %v234 = vpack.c.b16 %v229, %v228
    %v241 = vsel %vm144, %v208, 0
    %v244 = vsel %vm144, %v209, 0
    %246 = vmatprep.subr.bf16.mxu0 0
    %247 = vmatpush1.bf16.msra.mxu0 %v230
    %248 = vmatprep.subr.bf16.mxu0 0
    %249 = vmatpush1.bf16.msra.mxu0 %v231
    %250 = vmatprep.subr.bf16.mxu0 0
    %251 = vmatpush1.bf16.msra.mxu0 %v232
    %252 = vmatprep.subr.bf16.mxu0 0
    %253 = vmatpush1.bf16.msra.mxu0 %v233
    %254 = vmatprep.subr.bf16.mxu0 0
    %255 = vmatpush1.bf16.msra.mxu0 %v234
    %256 = vmatprep.subr.bf16.mxu0 0
    %257 = vmatpush1.bf16.msra.mxu0 0
    %258 = vmatprep.subr.bf16.mxu0 0
    %259 = vmatpush1.bf16.msra.mxu0 0
    %260 = vmatprep.subr.bf16.mxu0 0
    %261 = vmatpush1.bf16.msra.mxu0 0
    %262 = vmatprep.subr.bf16.mxu0 0
    %263 = vmatpush1.bf16.msra.mxu0 0
    %264 = vmatprep.subr.bf16.mxu0 0
    %265 = vmatpush1.bf16.msra.mxu0 0
    %266 = vmatprep.subr.bf16.mxu0 0
    %267 = vmatpush1.bf16.msra.mxu0 0
    %268 = vmatprep.subr.bf16.mxu0 0
    %269 = vmatpush1.bf16.msra.mxu0 0
    %270 = vmatprep.subr.bf16.mxu0 0
    %271 = vmatpush1.bf16.msra.mxu0 0
    %272 = vmatprep.subr.bf16.mxu0 0
    %273 = vmatpush1.bf16.msra.mxu0 0
    %274 = vmatprep.subr.bf16.mxu0 0
    %275 = vmatpush1.bf16.msra.mxu0 0
    %276 = vmatprep.subr.bf16.mxu0 0
    %277 = vmatpush1.bf16.msra.mxu0 0
    %278 = vmatprep.mubr.bf16.mxu0 0
    %279 = vmatmul.mubr.bf16.gmra.mrb[0].mxu0 %v241
    %v280 = vpop.f32.mrb[0].mxu0
    %v281 = vadd.f32 %v186, %v280
    %v282 = vpop.f32.mrb[0].mxu0
    %v283 = vpop.f32.mrb[0].mxu0
    %v284 = vadd.f32 %v189, %v283
    %v285 = vpop.f32.mrb[0].mxu0
    %286 = vmatprep.mubr.bf16.mxu0 0
    %287 = vmatmul.mubr.bf16.gmra.mrb[0].mxu0 %v244
    %v288 = vpop.f32.mrb[0].mxu0
    %v289 = vadd.f32 %v194, %v288
    %v290 = vpop.f32.mrb[0].mxu0
    %v291 = vpop.f32.mrb[0].mxu0
    %v292 = vadd.f32 %v197, %v291
    %v293 = vpop.f32.mrb[0].mxu0
    %294 = vdwg.mxu0
    %v295 = vld [vmem:[%s0] sm:$0xe]
    %v296 = vld [vmem:[%s0 + $0xc] sm:$0xe]
    %vm301 = vcmask 1042432
    %vm302 = vcmask 1046532
    %vm303 = vmor %vm301, %vm302
    %v304 = vrot.slane %v295, 5
    %v305 = vrot.slane %v304, 4
    %v306 = vrot.slane %v31, 5
    %v307 = vsel %vm303, %v305, %v306
    %v308 = vrot.slane %v306, 4
    %v309 = vrot.slane %v44, 5
    %v310 = vsel %vm303, %v308, %v309
    %v311 = vrot.slane %v296, 5
    %v312 = vrot.slane %v311, 4
    %v313 = vrot.slane %v33, 5
    %v314 = vsel %vm303, %v312, %v313
    %v315 = vrot.slane %v313, 4
    %v316 = vrot.slane %v45, 5
    %v317 = vsel %vm303, %v315, %v316
    %s318 = scalar_lea.vmem [#allocation2], 80
    %v319 = vld [vmem:[%s318] sm:$0xf]
    %v320 = vld [vmem:[%s318 + $0x4] sm:$0xf]
    %v321 = vld [vmem:[%s318 + $0x8] sm:$0xf]
    %v322 = vld [vmem:[%s318 + $0xc] sm:$0xf]
    %v323 = vld [vmem:[%s318 + $0x10] sm:$0xf]
    %v324 = vld [vmem:[%s318 + $0x14] sm:$0xf]
    %v325 = vld [vmem:[%s318 + $0x18] sm:$0xf]
    %v326 = vld [vmem:[%s318 + $0x1c] sm:$0xf]
    %v327 = vld [vmem:[%s318 + $0x20] sm:$0xf]
    %v328 = vld [vmem:[%s318 + $0x24] sm:$0xf]
    %v329 = vunpack.c.l.b16 %v307
    %v330 = vunpack.c.l.b16 %v310
    %v331 = vunpack.c.l.b16 %v314
    %v332 = vunpack.c.l.b16 %v317
    %v333 = vpack.c.b16 %v330, %v329
    %v334 = vpack.c.b16 %v332, %v331
    %v345 = vunpack.c.l.b16 %v319
    %v346 = vunpack.c.l.b16 %v320
    %v347 = vunpack.c.l.b16 %v321
    %v348 = vunpack.c.l.b16 %v322
    %v349 = vunpack.c.l.b16 %v323
    %v350 = vunpack.c.l.b16 %v324
    %v351 = vunpack.c.l.b16 %v325
    %v352 = vunpack.c.l.b16 %v326
    %v353 = vunpack.c.l.b16 %v327
    %v354 = vunpack.c.l.b16 %v328
    %v355 = vpack.c.b16 %v346, %v345
    %v356 = vpack.c.b16 %v348, %v347
    %v357 = vpack.c.b16 %v350, %v349
    %v358 = vpack.c.b16 %v352, %v351
    %v359 = vpack.c.b16 %v354, %v353
    %v366 = vsel %vm144, %v333, 0
    %v369 = vsel %vm144, %v334, 0
    %371 = vmatprep.subr.bf16.mxu0 0
    %372 = vmatpush1.bf16.msra.mxu0 %v355
    %373 = vmatprep.subr.bf16.mxu0 0
    %374 = vmatpush1.bf16.msra.mxu0 %v356
    %375 = vmatprep.subr.bf16.mxu0 0
    %376 = vmatpush1.bf16.msra.mxu0 %v357
    %377 = vmatprep.subr.bf16.mxu0 0
    %378 = vmatpush1.bf16.msra.mxu0 %v358
    %379 = vmatprep.subr.bf16.mxu0 0
    %380 = vmatpush1.bf16.msra.mxu0 %v359
    %381 = vmatprep.subr.bf16.mxu0 0
    %382 = vmatpush1.bf16.msra.mxu0 0
    %383 = vmatprep.subr.bf16.mxu0 0
    %384 = vmatpush1.bf16.msra.mxu0 0
    %385 = vmatprep.subr.bf16.mxu0 0
    %386 = vmatpush1.bf16.msra.mxu0 0
    %387 = vmatprep.subr.bf16.mxu0 0
    %388 = vmatpush1.bf16.msra.mxu0 0
    %389 = vmatprep.subr.bf16.mxu0 0
    %390 = vmatpush1.bf16.msra.mxu0 0
    %391 = vmatprep.subr.bf16.mxu0 0
    %392 = vmatpush1.bf16.msra.mxu0 0
    %393 = vmatprep.subr.bf16.mxu0 0
    %394 = vmatpush1.bf16.msra.mxu0 0
    %395 = vmatprep.subr.bf16.mxu0 0
    %396 = vmatpush1.bf16.msra.mxu0 0
    %397 = vmatprep.subr.bf16.mxu0 0
    %398 = vmatpush1.bf16.msra.mxu0 0
    %399 = vmatprep.subr.bf16.mxu0 0
    %400 = vmatpush1.bf16.msra.mxu0 0
    %401 = vmatprep.subr.bf16.mxu0 0
    %402 = vmatpush1.bf16.msra.mxu0 0
    %403 = vmatprep.mubr.bf16.mxu0 0
    %404 = vmatmul.mubr.bf16.gmra.mrb[0].mxu0 %v366
    %v405 = vpop.f32.mrb[0].mxu0
    %v406 = vadd.f32 0.0, %v405
    %v407 = vpop.f32.mrb[0].mxu0
    %v408 = vpop.f32.mrb[0].mxu0
    %v409 = vadd.f32 0.0, %v408
    %v410 = vpop.f32.mrb[0].mxu0
    %411 = vmatprep.mubr.bf16.mxu0 0
    %412 = vmatmul.mubr.bf16.gmra.mrb[0].mxu0 %v369
    %v413 = vpop.f32.mrb[0].mxu0
    %v414 = vadd.f32 0.0, %v413
    %v415 = vpop.f32.mrb[0].mxu0
    %v416 = vpop.f32.mrb[0].mxu0
    %v417 = vadd.f32 0.0, %v416
    %v418 = vpop.f32.mrb[0].mxu0
    %419 = vdwg.mxu0
    %v420 = vadd.f32 %v281, %v406
    %v421 = vadd.f32 %v284, %v409
    %v422 = vadd.f32 %v289, %v414
    %v423 = vadd.f32 %v292, %v417
    %v424 = vld [vmem:[%s0 + $0x8] sm:$0x3]
    %v425 = vld [vmem:[%s0 + $0x14] sm:$0x3]
    %vm426 = vsmask.f32 2304
    %vm427 = vsmask.f32 6416
    %vm428 = vmor %vm426, %vm427
    %v430 = vshrl.u32 %v295, 16
    %v432 = vrot.slane %v430, 5
    %v433 = vshll.u32 %v295, 16
    %v435 = vrot.slane %v433, 6
    %v436 = vor.u32 %v432, %v435
    %v437 = vrot.slane %v436, 4
    %v438 = vrot.slane %v63, 5
    %v439 = vrot.slane %v59, 6
    %v440 = vor.u32 %v438, %v439
    %v441 = vsel %vm428, %v437, %v440
    %v442 = vrot.slane %v440, 4
    %v444 = vshrl.u32 %v424, 16
    %v446 = vrot.slane %v444, 5
    %v447 = vshll.u32 %v424, 16
    %v449 = vrot.slane %v447, 6
    %v450 = vor.u32 %v446, %v449
    %v451 = vsel %vm428, %v442, %v450
    %v453 = vshrl.u32 %v296, 16
    %v455 = vrot.slane %v453, 5
    %v456 = vshll.u32 %v296, 16
    %v458 = vrot.slane %v456, 6
    %v459 = vor.u32 %v455, %v458
    %v460 = vrot.slane %v459, 4
    %v461 = vrot.slane %v87, 5
    %v462 = vrot.slane %v83, 6
    %v463 = vor.u32 %v461, %v462
    %v464 = vsel %vm428, %v460, %v463
    %v465 = vrot.slane %v463, 4
    %v467 = vshrl.u32 %v425, 16
    %v469 = vrot.slane %v467, 5
    %v470 = vshll.u32 %v425, 16
    %v472 = vrot.slane %v470, 6
    %v473 = vor.u32 %v469, %v472
    %v474 = vsel %vm428, %v465, %v473
    %s475 = scalar_lea.vmem [#allocation2], 120
    %v476 = vld [vmem:[%s475] sm:$0xf]
    %v477 = vld [vmem:[%s475 + $0x4] sm:$0xf]
    %v478 = vld [vmem:[%s475 + $0x8] sm:$0xf]
    %v479 = vld [vmem:[%s475 + $0xc] sm:$0xf]
    %v480 = vld [vmem:[%s475 + $0x10] sm:$0xf]
    %v481 = vld [vmem:[%s475 + $0x14] sm:$0xf]
    %v482 = vld [vmem:[%s475 + $0x18] sm:$0xf]
    %v483 = vld [vmem:[%s475 + $0x1c] sm:$0xf]
    %v484 = vld [vmem:[%s475 + $0x20] sm:$0xf]
    %v485 = vld [vmem:[%s475 + $0x24] sm:$0xf]
    %v486 = vunpack.c.l.b16 %v441
    %v487 = vunpack.c.l.b16 %v451
    %v488 = vunpack.c.l.b16 %v464
    %v489 = vunpack.c.l.b16 %v474
    %v490 = vpack.c.b16 %v487, %v486
    %v491 = vpack.c.b16 %v489, %v488
    %v502 = vunpack.c.l.b16 %v476
    %v503 = vunpack.c.l.b16 %v477
    %v504 = vunpack.c.l.b16 %v478
    %v505 = vunpack.c.l.b16 %v479
    %v506 = vunpack.c.l.b16 %v480
    %v507 = vunpack.c.l.b16 %v481
    %v508 = vunpack.c.l.b16 %v482
    %v509 = vunpack.c.l.b16 %v483
    %v510 = vunpack.c.l.b16 %v484
    %v511 = vunpack.c.l.b16 %v485
    %v512 = vpack.c.b16 %v503, %v502
    %v513 = vpack.c.b16 %v505, %v504
    %v514 = vpack.c.b16 %v507, %v506
    %v515 = vpack.c.b16 %v509, %v508
    %v516 = vpack.c.b16 %v511, %v510
    %v523 = vsel %vm144, %v490, 0
    %v526 = vsel %vm144, %v491, 0
    %528 = vmatprep.subr.bf16.mxu0 0
    %529 = vmatpush1.bf16.msra.mxu0 %v512
    %530 = vmatprep.subr.bf16.mxu0 0
    %531 = vmatpush1.bf16.msra.mxu0 %v513
    %532 = vmatprep.subr.bf16.mxu0 0
    %533 = vmatpush1.bf16.msra.mxu0 %v514
    %534 = vmatprep.subr.bf16.mxu0 0
    %535 = vmatpush1.bf16.msra.mxu0 %v515
    %536 = vmatprep.subr.bf16.mxu0 0
    %537 = vmatpush1.bf16.msra.mxu0 %v516
    %538 = vmatprep.subr.bf16.mxu0 0
    %539 = vmatpush1.bf16.msra.mxu0 0
    %540 = vmatprep.subr.bf16.mxu0 0
    %541 = vmatpush1.bf16.msra.mxu0 0
    %542 = vmatprep.subr.bf16.mxu0 0
    %543 = vmatpush1.bf16.msra.mxu0 0
    %544 = vmatprep.subr.bf16.mxu0 0
    %545 = vmatpush1.bf16.msra.mxu0 0
    %546 = vmatprep.subr.bf16.mxu0 0
    %547 = vmatpush1.bf16.msra.mxu0 0
    %548 = vmatprep.subr.bf16.mxu0 0
    %549 = vmatpush1.bf16.msra.mxu0 0
    %550 = vmatprep.subr.bf16.mxu0 0
    %551 = vmatpush1.bf16.msra.mxu0 0
    %552 = vmatprep.subr.bf16.mxu0 0
    %553 = vmatpush1.bf16.msra.mxu0 0
    %554 = vmatprep.subr.bf16.mxu0 0
    %555 = vmatpush1.bf16.msra.mxu0 0
    %556 = vmatprep.subr.bf16.mxu0 0
    %557 = vmatpush1.bf16.msra.mxu0 0
    %558 = vmatprep.subr.bf16.mxu0 0
    %559 = vmatpush1.bf16.msra.mxu0 0
    %560 = vmatprep.mubr.bf16.mxu0 0
    %561 = vmatmul.mubr.bf16.gmra.mrb[0].mxu0 %v523
    %v562 = vpop.f32.mrb[0].mxu0
    %v563 = vadd.f32 0.0, %v562
    %v564 = vpop.f32.mrb[0].mxu0
    %v565 = vpop.f32.mrb[0].mxu0
    %v566 = vadd.f32 0.0, %v565
    %v567 = vpop.f32.mrb[0].mxu0
    %568 = vmatprep.mubr.bf16.mxu0 0
    %569 = vmatmul.mubr.bf16.gmra.mrb[0].mxu0 %v526
    %v570 = vpop.f32.mrb[0].mxu0
    %v571 = vadd.f32 0.0, %v570
    %v572 = vpop.f32.mrb[0].mxu0
    %v573 = vpop.f32.mrb[0].mxu0
    %v574 = vadd.f32 0.0, %v573
    %v575 = vpop.f32.mrb[0].mxu0
    %576 = vdwg.mxu0
    %v577 = vadd.f32 %v420, %v563
    %v578 = vadd.f32 %v421, %v566
    %v579 = vadd.f32 %v422, %v571
    %v580 = vadd.f32 %v423, %v574
    %v581 = vld [vmem:[%s0] sm:$0xc]
    %v582 = vld [vmem:[%s0 + $0xc] sm:$0xc]
    %vm587 = vcmask 1041408
    %vm588 = vcmask 1045508
    %vm589 = vmor %vm587, %vm588
    %v590 = vrot.slane %v581, 6
    %v591 = vrot.slane %v590, 4
    %v592 = vrot.slane %v31, 6
    %v593 = vsel %vm589, %v591, %v592
    %v594 = vrot.slane %v592, 4
    %v595 = vrot.slane %v424, 6
    %v596 = vsel %vm589, %v594, %v595
    %v597 = vrot.slane %v582, 6
    %v598 = vrot.slane %v597, 4
    %v599 = vrot.slane %v33, 6
    %v600 = vsel %vm589, %v598, %v599
    %v601 = vrot.slane %v599, 4
    %v602 = vrot.slane %v425, 6
    %v603 = vsel %vm589, %v601, %v602
    %s604 = scalar_lea.vmem [#allocation2], 160
    %v605 = vld [vmem:[%s604] sm:$0xf]
    %v606 = vld [vmem:[%s604 + $0x4] sm:$0xf]
    %v607 = vld [vmem:[%s604 + $0x8] sm:$0xf]
    %v608 = vld [vmem:[%s604 + $0xc] sm:$0xf]
    %v609 = vld [vmem:[%s604 + $0x10] sm:$0xf]
    %v610 = vld [vmem:[%s604 + $0x14] sm:$0xf]
    %v611 = vld [vmem:[%s604 + $0x18] sm:$0xf]
    %v612 = vld [vmem:[%s604 + $0x1c] sm:$0xf]
    %v613 = vld [vmem:[%s604 + $0x20] sm:$0xf]
    %v614 = vld [vmem:[%s604 + $0x24] sm:$0xf]
    %v615 = vunpack.c.l.b16 %v593
    %v616 = vunpack.c.l.b16 %v596
    %v617 = vunpack.c.l.b16 %v600
    %v618 = vunpack.c.l.b16 %v603
    %v619 = vpack.c.b16 %v616, %v615
    %v620 = vpack.c.b16 %v618, %v617
    %v631 = vunpack.c.l.b16 %v605
    %v632 = vunpack.c.l.b16 %v606
    %v633 = vunpack.c.l.b16 %v607
    %v634 = vunpack.c.l.b16 %v608
    %v635 = vunpack.c.l.b16 %v609
    %v636 = vunpack.c.l.b16 %v610
    %v637 = vunpack.c.l.b16 %v611
    %v638 = vunpack.c.l.b16 %v612
    %v639 = vunpack.c.l.b16 %v613
    %v640 = vunpack.c.l.b16 %v614
    %v641 = vpack.c.b16 %v632, %v631
    %v642 = vpack.c.b16 %v634, %v633
    %v643 = vpack.c.b16 %v636, %v635
    %v644 = vpack.c.b16 %v638, %v637
    %v645 = vpack.c.b16 %v640, %v639
    %v652 = vsel %vm144, %v619, 0
    %v655 = vsel %vm144, %v620, 0
    %657 = vmatprep.subr.bf16.mxu0 0
    %658 = vmatpush1.bf16.msra.mxu0 %v641
    %659 = vmatprep.subr.bf16.mxu0 0
    %660 = vmatpush1.bf16.msra.mxu0 %v642
    %661 = vmatprep.subr.bf16.mxu0 0
    %662 = vmatpush1.bf16.msra.mxu0 %v643
    %663 = vmatprep.subr.bf16.mxu0 0
    %664 = vmatpush1.bf16.msra.mxu0 %v644
    %665 = vmatprep.subr.bf16.mxu0 0
    %666 = vmatpush1.bf16.msra.mxu0 %v645
    %667 = vmatprep.subr.bf16.mxu0 0
    %668 = vmatpush1.bf16.msra.mxu0 0
    %669 = vmatprep.subr.bf16.mxu0 0
    %670 = vmatpush1.bf16.msra.mxu0 0
    %671 = vmatprep.subr.bf16.mxu0 0
    %672 = vmatpush1.bf16.msra.mxu0 0
    %673 = vmatprep.subr.bf16.mxu0 0
    %674 = vmatpush1.bf16.msra.mxu0 0
    %675 = vmatprep.subr.bf16.mxu0 0
    %676 = vmatpush1.bf16.msra.mxu0 0
    %677 = vmatprep.subr.bf16.mxu0 0
    %678 = vmatpush1.bf16.msra.mxu0 0
    %679 = vmatprep.subr.bf16.mxu0 0
    %680 = vmatpush1.bf16.msra.mxu0 0
    %681 = vmatprep.subr.bf16.mxu0 0
    %682 = vmatpush1.bf16.msra.mxu0 0
    %683 = vmatprep.subr.bf16.mxu0 0
    %684 = vmatpush1.bf16.msra.mxu0 0
    %685 = vmatprep.subr.bf16.mxu0 0
    %686 = vmatpush1.bf16.msra.mxu0 0
    %687 = vmatprep.subr.bf16.mxu0 0
    %688 = vmatpush1.bf16.msra.mxu0 0
    %689 = vmatprep.mubr.bf16.mxu0 0
    %690 = vmatmul.mubr.bf16.gmra.mrb[0].mxu0 %v652
    %v691 = vpop.f32.mrb[0].mxu0
    %v692 = vadd.f32 0.0, %v691
    %v693 = vpop.f32.mrb[0].mxu0
    %v694 = vpop.f32.mrb[0].mxu0
    %v695 = vadd.f32 0.0, %v694
    %v696 = vpop.f32.mrb[0].mxu0
    %697 = vmatprep.mubr.bf16.mxu0 0
    %698 = vmatmul.mubr.bf16.gmra.mrb[0].mxu0 %v655
    %v699 = vpop.f32.mrb[0].mxu0
    %v700 = vadd.f32 0.0, %v699
    %v701 = vpop.f32.mrb[0].mxu0
    %v702 = vpop.f32.mrb[0].mxu0
    %v703 = vadd.f32 0.0, %v702
    %v704 = vpop.f32.mrb[0].mxu0
    %705 = vdwg.mxu0
    %v706 = vadd.f32 %v577, %v692
    %v707 = vadd.f32 %v578, %v695
    %v708 = vadd.f32 %v579, %v700
    %v709 = vadd.f32 %v580, %v703
    %v710 = vld [vmem:[%s2] sm:$0x1]
    %v712 = vlaneseq
    %v713 = vshrl.u32 %v712, 7
    %v714 = vsub.s32 0, %v713
    %v715 = vrot.slane %v710, %v714
    %v717 = vadd.f32 %v706, %v715
    %v718 = vadd.f32 %v707, %v715
    %v719 = vadd.f32 %v708, %v715
    %v720 = vadd.f32 %v709, %v715
    %v721 = vmax.f32 %v717, 0.0
    %v722 = vmax.f32 %v718, 0.0
    %v723 = vmax.f32 %v719, 0.0
    %v724 = vmax.f32 %v720, 0.0
    %725 = vst [vmem:[#allocation5] sm:$0xff] %v721
    %726 = vst [vmem:[#allocation5 + $0x8] sm:$0xff] %v722
    %727 = vst [vmem:[#allocation5 + $0x10] sm:$0xff] %v723
    %728 = vst [vmem:[#allocation5 + $0x18] sm:$0xff] %v724
    // Predicated region
    $region18: #{tpu_custom_call.1} parent=1 // pred_check
      _
    $region19: #{tpu_custom_call.1} parent=1 // pred_check_branch
      %730 = sbr.rel (0) target = $region21
    $region20: #{tpu_custom_call.1} parent=1 // pred_region
      %s732 = ssub.s32 512, 512
      %733 = vsyncadd [#allocation4], %s732
      %s734 = sshll.u32 [#allocation5], 4
      %s735 = int_to_ptr.vmem [resolvable:$true] %s734
      %740 = dma.vmem_to_hbm [thread:$0]  %s735, 512, %s3, [#allocation4], 128, 128, 8
    $region21: #{tpu_custom_call.1} parent=1 // pred_fallthru
      _
    // Predicated region
    $region22: #{tpu_custom_call.1} parent=1 // pred_check
      _
    $region23: #{tpu_custom_call.1} parent=1 // pred_check_branch
      %742 = sbr.rel (0) target = $region25
    $region24: #{tpu_custom_call.1} parent=1 // pred_region
      %743 = dma.done [#allocation4], 512
    $region25: #{tpu_custom_call.1} parent=1 // pred_fallthru
      _
    %744 = vsyncpa [#allocation3], 1
    %745 = vsyncpa [#allocation4], 1

</llo_original>
